<compile_context>
chip_gen: v6e
topology: v6e:2x2x1
jax: 0.10.0
libtpu: 0.0.40
codegen_flags: <defaults>
</compile_context>

<pallas_src>
import functools

import jax
import jax.numpy as jnp
from jax.experimental import pallas as pl
from jax.experimental.pallas import tpu as pltpu


def _cdiv(a, b):
  return -(-a // b)


def _round_up(x, m):
  return _cdiv(x, m) * m


def _choose_tm(m, block_m):
  """M-tile: multiple of 16, divides M when possible, >= 2 grid steps if M > 16."""
  if m <= 16:
    return _round_up(m, 8)
  cap = min(block_m, _round_up(_cdiv(m, 2), 16))
  cap = max(16, (cap // 16) * 16)
  for tm in range(cap, 15, -16):
    if m % tm == 0:
      return tm
  return cap


def _patch_embed_kernel(xp_ref, w_ref, b_ref, o_ref):
  """One M-tile of the patch-embedding matmul.

  xp_ref : (tm, Kp)  flattened patches (compute dtype, e.g. bf16)
  w_ref  : (Kp, Ep)  flattened conv weight (compute dtype)
  b_ref  : (1, Ep)   conv bias (f32)
  o_ref  : (tm, Ep)  output tokens (output dtype)
  """
  acc = jnp.dot(xp_ref[...], w_ref[...], preferred_element_type=jnp.float32)
  o_ref[...] = (acc + b_ref[...]).astype(o_ref.dtype)


@functools.partial(
    jax.jit, static_argnames=("patch_size", "block_m", "compute_dtype"))
def patch_embedding_pallas(x, w, b, *, patch_size, block_m=1024,
                           compute_dtype=jnp.bfloat16):
  """PatchEmbedding.forward.

  x : (B, C, H, W)   NCHW input (PyTorch layout)
  w : (E, C, p, p)   PyTorch Conv2d weight (OIHW)
  b : (E,)           Conv2d bias
  returns (tokens (B, Hp*Wp, E), (Hp, Wp))
  """
  B, C, H, W = x.shape
  E = w.shape[0]
  p = patch_size
  assert H % p == 0 and W % p == 0
  Hp, Wp = H // p, W // p
  NP = Hp * Wp
  K = C * p * p
  M = B * NP

  # --- wrapper-side layout plumbing: im2col fused with the compute cast -----
  # (B, C, Hp, p, Wp, p) -> (B, Hp, Wp, C, p, p) -> (M, K); the (C, p, p)
  # ordering matches the OIHW weight reshape below.
  xp = (x.reshape(B, C, Hp, p, Wp, p)
          .transpose(0, 2, 4, 1, 3, 5)
          .reshape(M, K)
          .astype(compute_dtype))
  wmat = w.reshape(E, K).T.astype(compute_dtype)          # (K, E)

  # Pad K only to the sublane pack of the compute dtype (no 128 padding).
  sub = 8 * (4 // jnp.dtype(compute_dtype).itemsize)      # 8 f32 / 16 bf16
  Kp = _round_up(K, sub)
  if Kp != K:
    xp = jnp.pad(xp, ((0, 0), (0, Kp - K)))
    wmat = jnp.pad(wmat, ((0, Kp - K), (0, 0)))

  # Pad E to a lane multiple so output stores are lane-dense; no-op when E is
  # already a multiple of 128 (padded columns get zero weight & bias).
  Ep = _round_up(E, 128)
  if Ep != E:
    wmat = jnp.pad(wmat, ((0, 0), (0, Ep - E)))
    bvec = jnp.pad(b, (0, Ep - E))
  else:
    bvec = b
  b2 = bvec.astype(jnp.float32).reshape(1, Ep)

  # M tiling: divide M exactly when possible; >= 2 grid steps for v7x megacore.
  tm = _choose_tm(M, block_m)
  Mp = _round_up(M, tm)
  if Mp != M:
    xp = jnp.pad(xp, ((0, Mp - M), (0, 0)))

  # Explicit VMEM budget (double-buffered operands + output) so larger tiles
  # fit under the scoped defaults (16 MiB v5e, 32 MiB v6e/v7x).
  in_b = jnp.dtype(compute_dtype).itemsize
  out_b = jnp.dtype(x.dtype).itemsize
  needed = 2 * (tm * Kp * in_b + Kp * Ep * in_b + Ep * 4 + tm * Ep * out_b)
  vmem_limit = int(min(max(needed + (2 << 20), 32 << 20), 64 << 20))

  out = pl.pallas_call(
      _patch_embed_kernel,
      out_shape=jax.ShapeDtypeStruct((Mp, Ep), x.dtype),
      grid_spec=pltpu.PrefetchScalarGridSpec(
          num_scalar_prefetch=0,
          grid=(Mp // tm,),
          in_specs=[
              pl.BlockSpec((tm, Kp), lambda i: (i, 0)),
              pl.BlockSpec((Kp, Ep), lambda i: (0, 0)),   # grid-invariant weight
              pl.BlockSpec((1, Ep), lambda i: (0, 0)),    # grid-invariant bias
          ],
          out_specs=pl.BlockSpec((tm, Ep), lambda i: (i, 0)),
      ),
      compiler_params=pltpu.CompilerParams(
          dimension_semantics=("parallel",),
          vmem_limit_bytes=vmem_limit),
  )(xp, wmat, b2)

  tokens = out
  if Mp != M or Ep != E:
    tokens = tokens[:M, :E]
  tokens = tokens.reshape(B, NP, E)
  return tokens, (Hp, Wp)


def patch_embedding_reference(x, w, b, patch_size, compute_dtype=None):
  """Plain-JAX reference: strided conv + flatten + transpose (same math)."""
  xc, wc = (x, w) if compute_dtype is None else (x.astype(compute_dtype),
                                                 w.astype(compute_dtype))
  out = jax.lax.conv_general_dilated(
      xc, wc, window_strides=(patch_size, patch_size), padding="VALID",
      dimension_numbers=("NCHW", "OIHW", "NCHW"),
      preferred_element_type=jnp.float32)
  out = (out + b[None, :, None, None].astype(jnp.float32)).astype(x.dtype)
  B, E, Hp, Wp = out.shape
  tokens = out.reshape(B, E, Hp * Wp).transpose(0, 2, 1)
  return tokens, (Hp, Wp)


if __name__ == "__main__":
  # Small shapes consistent with the module:
  # image_size=32, patch_size=4, in_channels=3, embedding_dim=128, batch=2
  #   -> 8x8 = 64 patches per image, K = 3*4*4 = 48, tokens (2, 64, 128).
  B, C, IMG, P, E = 2, 3, 32, 4, 128

  ks = jax.random.split(jax.random.PRNGKey(0), 3)
  f32 = jnp.float32
  x = jax.random.normal(ks[0], (B, C, IMG, IMG), f32)
  w = 0.1 * jax.random.normal(ks[1], (E, C, P, P), f32)   # PyTorch OIHW weight
  b = 0.1 * jax.random.normal(ks[2], (E,), f32)

  tokens, (Hp, Wp) = patch_embedding_pallas(x, w, b, patch_size=P)
  tokens = jax.block_until_ready(tokens)

  # Reference with the same bf16 operand rounding (tight tolerance) ...
  ref_bf16, (rHp, rWp) = patch_embedding_reference(
      x, w, b, P, compute_dtype=jnp.bfloat16)
  # ... and the full-f32 conv (loose tolerance covers bf16 operand rounding).
  ref_f32, _ = patch_embedding_reference(x, w, b, P)

  assert (Hp, Wp) == (rHp, rWp) == (IMG // P, IMG // P)
  assert tokens.shape == (B, (IMG // P) ** 2, E), tokens.shape
  err_b = float(jnp.max(jnp.abs(tokens - ref_bf16)))
  err_f = float(jnp.max(jnp.abs(tokens - ref_f32)))
  assert jnp.allclose(tokens, ref_bf16, atol=1e-2, rtol=1e-2), \
      f"max abs err vs bf16 reference {err_b}"
  assert jnp.allclose(tokens, ref_f32, atol=6e-2, rtol=6e-2), \
      f"max abs err vs f32 reference {err_f}"

  print("KERNEL_OK")
</pallas_src>

<mosaic_0001>
module attributes {stable_mosaic.version = 11 : i64} {
  func.func @_patch_embed_kernel(%arg0: i32, %arg1: memref<64x48xbf16, #tpu.memory_space<vmem>>, %arg2: memref<48x128xbf16, #tpu.memory_space<vmem>>, %arg3: memref<1x128xf32, #tpu.memory_space<vmem>>, %arg4: memref<64x128xf32, #tpu.memory_space<vmem>>) attributes {dimension_semantics = [#tpu.dimension_semantics<parallel>], iteration_bounds = array<i64: 2>, scalar_prefetch = 0 : i64, scratch_operands = 0 : i64, tpu.core_type = #tpu.core_type<tc>, window_params = [{transform_indices = @transform_0, window_bounds = array<i64: 64, 48>}, {pipeline_mode = #tpu.pipeline_mode<synchronous>, transform_indices = @transform_1, window_bounds = array<i64: 48, 128>}, {pipeline_mode = #tpu.pipeline_mode<synchronous>, transform_indices = @transform_2, window_bounds = array<i64: 1, 128>}, {transform_indices = @transform_3, window_bounds = array<i64: 64, 128>}]} {
    %c0 = arith.constant 0 : index
    %c0_0 = arith.constant 0 : index
    %0 = vector.load %arg1[%c0, %c0_0] : memref<64x48xbf16, #tpu.memory_space<vmem>>, vector<64x48xbf16>
    %c0_1 = arith.constant 0 : index
    %c0_2 = arith.constant 0 : index
    %1 = vector.load %arg2[%c0_1, %c0_2] : memref<48x128xbf16, #tpu.memory_space<vmem>>, vector<48x128xbf16>
    %cst = arith.constant dense<0.000000e+00> : vector<64x128xf32>
    %2 = tpu.matmul %0, %1, %cst {dimension_numbers = #tpu.dot_dimension_numbers<[1], [0], [0], [1], [0, 0, 1, 1], [], []>} : vector<64x48xbf16>, vector<48x128xbf16>, vector<64x128xf32> -> vector<64x128xf32>
    %c0_3 = arith.constant 0 : index
    %c0_4 = arith.constant 0 : index
    %3 = vector.load %arg3[%c0_3, %c0_4] : memref<1x128xf32, #tpu.memory_space<vmem>>, vector<1x128xf32>
    %4 = vector.broadcast %3 : vector<1x128xf32> to vector<64x128xf32>
    %5 = arith.addf %2, %4 : vector<64x128xf32>
    %c0_5 = arith.constant 0 : index
    %c0_6 = arith.constant 0 : index
    %6 = vector.load %arg4[%c0_5, %c0_6] : memref<64x128xf32, #tpu.memory_space<vmem>>, vector<64x128xf32>
    tpu.vector_store %arg4[%c0_5, %c0_6], %5 {strides = array<i32>} : memref<64x128xf32, #tpu.memory_space<vmem>>, vector<64x128xf32>,
    return
  }
  func.func @transform_0(%arg0: i32) -> (i32, i32) {
    %c0_i32 = arith.constant 0 : i32
    %c0_i32_0 = arith.constant 0 : i32
    return %arg0, %c0_i32 : i32, i32
  }
  func.func @transform_1(%arg0: i32) -> (i32, i32) {
    %c0_i32 = arith.constant 0 : i32
    %c0_i32_0 = arith.constant 0 : i32
    %c0_i32_1 = arith.constant 0 : i32
    return %c0_i32, %c0_i32_0 : i32, i32
  }
  func.func @transform_2(%arg0: i32) -> (i32, i32) {
    %c0_i32 = arith.constant 0 : i32
    %c0_i32_0 = arith.constant 0 : i32
    %c0_i32_1 = arith.constant 0 : i32
    return %c0_i32, %c0_i32_0 : i32, i32
  }
  func.func @transform_3(%arg0: i32) -> (i32, i32) {
    %c0_i32 = arith.constant 0 : i32
    %c0_i32_0 = arith.constant 0 : i32
    return %arg0, %c0_i32 : i32, i32
  }
}

</mosaic_0001>

<llo_original>
// kernel: patch_embedding_pallas.1
$region0: #{patch_embedding_pallas.1}
  #allocation0 [shape = 'u32[]', space=smem, size = 0x4, offset = 0x4, fixed_abs, tag = 'smem constant byte address 0x4 - core index']
  #allocation1 [shape = 'u32[144,128]{1,0:T(1,128)}', space=vmem, size = 0x12000, scoped, tag = 'internal scratch']
  %s0 = inlined_call_operand.vmem [shape: bf16[128,48], index: 0, kind: input, shape index: {}]
  %s1 = inlined_call_operand.vmem [shape: bf16[48,128], index: 1, kind: input, shape index: {}]
  %s2 = inlined_call_operand.vmem [shape: f32[1,128], index: 2, kind: input, shape index: {}]
  %s3 = inlined_call_operand.hbm [shape: f32[128,128], index: 3, kind: output, shape index: {}]
  %s4 = sld [smem:[#allocation0]]
  $region45: #{patch_embedding_pallas.1} parent=0
    _
  %s6 = ssub.s32 1, %s4
  %s7 = scalar_select 0, %s6, %s4
  $region1: #{patch_embedding_pallas.1} parent=0
    #allocation2 [shape = 'u8[65536]{0}', space=vmem, size = 0x10000, scoped, tag = 'output window, operand 0']
    #allocation3 [shape = 's32[2]{0}', space=sflag, size = 0x8, scoped, tag = 'scoped memory for patch_embedding_pallas.1']
    %8 = vsyncpa [#allocation3], 0
    %s9 = scalar_lea.sflag [#allocation3], 1
    %10 = vsyncpa %s9, 0
    loop: start=0, step=1, limit=4
    $region2: #{patch_embedding_pallas.1} parent=1 // loop_pre_header
      _
    $region3: #{patch_embedding_pallas.1} parent=1 // loop_header
      %s12 = sphi 0, %s16
      %p13 = scmp.ge.s32.totalorder %s12, 4
      %s22 = sphi 0, %s24
      %s25 = sphi 0, %s22
      %s26 = sphi 0, %s25
      %s42 = sphi 0, %s26
      %s46 = sphi 0, %s46
      %s48 = sphi 0, %s46
      %s49 = sphi 0, %s48
      %s63 = sphi 0, %s49
      %s67 = sphi 0, %s67
      %s69 = sphi 0, %s67
      %s70 = sphi 0, %s69
      %s84 = sphi 0, %s70
      %s90 = sphi 0, %s92
      %s93 = sphi 0, %s90
      %s94 = sphi 0, %s93
      %s110 = sphi 0, %s94
    $region4: #{patch_embedding_pallas.1} parent=1 // loop_header_branch
      %15 = sbr.rel (%p13) target = $region8
    $region5: #{patch_embedding_pallas.1} parent=1 // loop_body
      %s17 = ssub.s32 %s12, 1
      %s18 = ssub.s32 %s12, 2
      %s19 = sadd.s32 %s12, 1
      %s20 = ssub.s32 %s12, %s19
      %p21 = scmp.eq.s32.totalorder %s20, 0
      %s23 = sadd.s32 %s22, 1
      %s24 = scalar_select %p21, %s22, %s23
      %p27 = pneg %p21
      %p28 = scmp.eq.s32.totalorder %s12, 1
      %p29 = por %p27, %p28
      %p30 = scmp.ne.s32.totalorder %s22, %s25
      %p31 = scmp.eq.s32.totalorder %s12, 0
      %p32 = por %p30, %p31
      %p33 = scmp.ne.s32.totalorder %s22, %s25
      %p34 = scmp.eq.s32.totalorder %s17, 1
      %p35 = por %p33, %p34
      %p36 = scmp.ne.s32.totalorder %s25, %s26
      %p37 = scmp.eq.s32.totalorder %s17, 0
      %p38 = por %p36, %p37
      %p39 = scmp.ne.s32.totalorder %s25, %s26
      %p40 = scmp.eq.s32.totalorder %s18, 1
      %p41 = por %p39, %p40
      %p43 = scmp.ne.s32.totalorder %s26, %s42
      %p44 = scmp.eq.s32.totalorder %s18, 0
      %p45 = por %p43, %p44
      %s47 = sadd.s32 %s46, 1
      %p50 = scmp.eq.s32.totalorder %s12, 1
      %p51 = scmp.ne.s32.totalorder %s46, %s48
      %p52 = scmp.eq.s32.totalorder %s12, 0
      %p53 = por %p51, %p52
      %p54 = scmp.ne.s32.totalorder %s46, %s48
      %p55 = scmp.eq.s32.totalorder %s17, 1
      %p56 = por %p54, %p55
      %p57 = scmp.ne.s32.totalorder %s48, %s49
      %p58 = scmp.eq.s32.totalorder %s17, 0
      %p59 = por %p57, %p58
      %p60 = scmp.ne.s32.totalorder %s48, %s49
      %p61 = scmp.eq.s32.totalorder %s18, 1
      %p62 = por %p60, %p61
      %p64 = scmp.ne.s32.totalorder %s49, %s63
      %p65 = scmp.eq.s32.totalorder %s18, 0
      %p66 = por %p64, %p65
      %s68 = sadd.s32 %s67, 1
      %p71 = scmp.eq.s32.totalorder %s12, 1
      %p72 = scmp.ne.s32.totalorder %s67, %s69
      %p73 = scmp.eq.s32.totalorder %s12, 0
      %p74 = por %p72, %p73
      %p75 = scmp.ne.s32.totalorder %s67, %s69
      %p76 = scmp.eq.s32.totalorder %s17, 1
      %p77 = por %p75, %p76
      %p78 = scmp.ne.s32.totalorder %s69, %s70
      %p79 = scmp.eq.s32.totalorder %s17, 0
      %p80 = por %p78, %p79
      %p81 = scmp.ne.s32.totalorder %s69, %s70
      %p82 = scmp.eq.s32.totalorder %s18, 1
      %p83 = por %p81, %p82
      %p85 = scmp.ne.s32.totalorder %s70, %s84
      %p86 = scmp.eq.s32.totalorder %s18, 0
      %p87 = por %p85, %p86
      %s88 = ssub.s32 %s12, %s19
      %p89 = scmp.eq.s32.totalorder %s88, 0
      %s91 = sadd.s32 %s90, 1
      %s92 = scalar_select %p89, %s90, %s91
      %p95 = pneg %p89
      %p96 = scmp.eq.s32.totalorder %s12, 1
      %p97 = por %p95, %p96
      %p98 = scmp.ne.s32.totalorder %s90, %s93
      %p99 = scmp.eq.s32.totalorder %s12, 0
      %p100 = por %p98, %p99
      %p101 = scmp.ne.s32.totalorder %s90, %s93
      %p102 = scmp.eq.s32.totalorder %s17, 1
      %p103 = por %p101, %p102
      %p104 = scmp.ne.s32.totalorder %s93, %s94
      %p105 = scmp.eq.s32.totalorder %s17, 0
      %p106 = por %p104, %p105
      %p107 = scmp.ne.s32.totalorder %s93, %s94
      %p108 = scmp.eq.s32.totalorder %s18, 1
      %p109 = por %p107, %p108
      %p111 = scmp.ne.s32.totalorder %s94, %s110
      %p112 = scmp.eq.s32.totalorder %s18, 0
      %p113 = por %p111, %p112
      %p114 = scmp.le.s32.totalorder 1, %s12
      %p115 = scmp.lt.s32.totalorder %s12, 3
      %p116 = pnand %p114, %p115
      %p117 = pneg %p116
      // Predicated region
      $region9: #{patch_embedding_pallas.1} parent=5 // pred_check
        _
      $region10: #{patch_embedding_pallas.1} parent=5 // pred_check_branch
        %119 = sbr.rel (%p116) target = $region12
      $region11: #{patch_embedding_pallas.1} parent=5 // pred_region
        %s120 = ssub.s32 %s12, 1
        // Predicated region
        $region13: #{patch_embedding_pallas.1} parent=11 // pred_check
          %p121 = pneg %p59
        $region14: #{patch_embedding_pallas.1} parent=11 // pred_check_branch
          %123 = sbr.rel (%p121) target = $region16
        $region15: #{patch_embedding_pallas.1} parent=11 // pred_region
          _
        $region16: #{patch_embedding_pallas.1} parent=11 // pred_fallthru
          _
        // Predicated region
        $region17: #{patch_embedding_pallas.1} parent=11 // pred_check
          %p124 = pneg %p80
        $region18: #{patch_embedding_pallas.1} parent=11 // pred_check_branch
          %126 = sbr.rel (%p124) target = $region20
        $region19: #{patch_embedding_pallas.1} parent=11 // pred_region
          _
        $region20: #{patch_embedding_pallas.1} parent=11 // pred_fallthru
          _
      $region12: #{patch_embedding_pallas.1} parent=5 // pred_fallthru
        _
      %p127 = scmp.lt.s32.totalorder %s12, 2
      // Predicated region
      $region21: #{patch_embedding_pallas.1} parent=5 // pred_check
        %p128 = pneg %p127
      $region22: #{patch_embedding_pallas.1} parent=5 // pred_check_branch
        %130 = sbr.rel (%p128) target = $region24
      $region23: #{patch_embedding_pallas.1} parent=5 // pred_region
        // Predicated region
        $region25: #{patch_embedding_pallas.1} parent=23 // pred_check
          %p131 = pneg %p32
        $region26: #{patch_embedding_pallas.1} parent=23 // pred_check_branch
          %133 = sbr.rel (%p131) target = $region28
        $region27: #{patch_embedding_pallas.1} parent=23 // pred_region
          %s134 = smul.u32 8, %s12
          %p135 = scmp.lt.s32.totalorder %s134, 15
          %s136 = scalar_select %p135, %s134, 15
          %s137 = smul.addr %s136, 4
          %s138 = scalar_lea.vmem %s0, %s137
          %s139 = smul.u32 8, %s12
        $region28: #{patch_embedding_pallas.1} parent=23 // pred_fallthru
          _
      $region24: #{patch_embedding_pallas.1} parent=5 // pred_fallthru
        _
      %p140 = scmp.le.s32.totalorder 1, %s12
      %p141 = scmp.lt.s32.totalorder %s12, 3
      %p142 = pnand %p140, %p141
      %p143 = pneg %p142
      // Predicated region
      $region29: #{patch_embedding_pallas.1} parent=5 // pred_check
        _
      $region30: #{patch_embedding_pallas.1} parent=5 // pred_check_branch
        %145 = sbr.rel (%p142) target = $region32
      $region31: #{patch_embedding_pallas.1} parent=5 // pred_region
        %s146 = ssub.s32 %s12, 1
        %s147 = smul.u32 8, %s17
        %p148 = scmp.lt.s32.totalorder %s147, 15
        %s149 = scalar_select %p148, %s147, 15
        %s150 = smul.addr %s149, 4
        %s151 = scalar_lea.vmem %s0, %s150
        %p152 = pneg %p38
        %p153 = pneg %p35
        %p154 = pneg %p59
        %p155 = pneg %p56
        %p156 = pneg %p80
        %p157 = pneg %p77
        %p158 = pneg %p106
        %p159 = pneg %p103
        %s160 = sand.u32 %s93, 1
        %s161 = scalar_lea.sflag [#allocation3], %s160
        %s162 = sand.u32 %s93, 1
        %s163 = smul.addr %s162, 64
        %s164 = scalar_lea.vmem [#allocation2], %s163
        %s165 = smul.u32 8, %s17
        %p166 = scmp.lt.s32.totalorder %s165, 15
        %s167 = scalar_select %p166, %s165, 15
        %s168 = smul.addr %s167, 4
        %s169 = scalar_lea.vmem %s0, %s168
        %s170 = smul.u32 8, %s17
        %s171 = smul.u32 8, %s17
        %v173 = vld [vmem:[%s169] sm:$0xf]
        %v174 = vld [vmem:[%s169 + $0x4] sm:$0xf]
        %v175 = vld [vmem:[%s169 + $0x8] sm:$0xf]
        %v176 = vld [vmem:[%s169 + $0xc] sm:$0xf]
        %v177 = vld [vmem:[%s169 + $0x10] sm:$0xf]
        %v178 = vld [vmem:[%s169 + $0x14] sm:$0xf]
        %v179 = vld [vmem:[%s169 + $0x18] sm:$0xf]
        %v180 = vld [vmem:[%s169 + $0x1c] sm:$0xf]
        %v181 = vld [vmem:[%s1] sm:$0xf]
        %v182 = vld [vmem:[%s1 + $0x4] sm:$0xf]
        %v183 = vld [vmem:[%s1 + $0x8] sm:$0xf]
        %v184 = vld [vmem:[%s1 + $0xc] sm:$0xf]
        %v185 = vld [vmem:[%s1 + $0x10] sm:$0xf]
        %v186 = vld [vmem:[%s1 + $0x14] sm:$0xf]
        %v187 = vld [vmem:[%s2] sm:$0x1]
        %v189 = vlaneseq
        %v190 = vshrl.u32 %v189, 7
        %v191 = vsub.s32 0, %v190
        %v192 = vrot.slane %v187, %v191
        %v202 = vunpack.c.l.b16 %v173
        %v203 = vunpack.c.l.b16 %v174
        %v204 = vunpack.c.l.b16 %v175
        %v205 = vunpack.c.l.b16 %v176
        %v206 = vunpack.c.l.b16 %v177
        %v207 = vunpack.c.l.b16 %v178
        %v208 = vunpack.c.l.b16 %v179
        %v209 = vunpack.c.l.b16 %v180
        %v210 = vpack.c.b16 %v203, %v202
        %v211 = vpack.c.b16 %v205, %v204
        %v212 = vpack.c.b16 %v207, %v206
        %v213 = vpack.c.b16 %v209, %v208
        %v220 = vunpack.c.l.b16 %v181
        %v221 = vunpack.c.l.b16 %v182
        %v222 = vunpack.c.l.b16 %v183
        %v223 = vunpack.c.l.b16 %v184
        %v224 = vunpack.c.l.b16 %v185
        %v225 = vunpack.c.l.b16 %v186
        %v226 = vpack.c.b16 %v221, %v220
        %v227 = vpack.c.b16 %v223, %v222
        %v228 = vpack.c.b16 %v225, %v224
        %vm232 = vcmask 392192
        %v234 = vsel %vm232, %v210, 0
        %v237 = vsel %vm232, %v211, 0
        %v240 = vsel %vm232, %v212, 0
        %v243 = vsel %vm232, %v213, 0
        %245 = vmatprep.subr.bf16.mxu0 0
        %246 = vmatpush1.bf16.msra.mxu0 0
        %247 = vmatprep.subr.bf16.mxu0 0
        %248 = vmatpush1.bf16.msra.mxu0 0
        %249 = vmatprep.subr.bf16.mxu0 0
        %250 = vmatpush1.bf16.msra.mxu0 0
        %251 = vmatprep.subr.bf16.mxu0 0
        %252 = vmatpush1.bf16.msra.mxu0 0
        %253 = vmatprep.subr.bf16.mxu0 0
        %254 = vmatpush1.bf16.msra.mxu0 0
        %255 = vmatprep.subr.bf16.mxu0 0
        %256 = vmatpush1.bf16.msra.mxu0 %v228
        %257 = vmatprep.subr.bf16.mxu0 0
        %258 = vmatpush1.bf16.msra.mxu0 %v227
        %259 = vmatprep.subr.bf16.mxu0 0
        %260 = vmatpush1.bf16.msra.mxu0 %v226
        %261 = vmatprep.subr.bf16.mxu0 0
        %262 = vmatpush2.bf16.msra.mxu0 0
        %263 = vmatprep.subr.bf16.mxu0 0
        %264 = vmatpush2.bf16.msra.mxu0 0
        %265 = vmatprep.subr.bf16.mxu0 0
        %266 = vmatpush2.bf16.msra.mxu0 0
        %267 = vmatprep.subr.bf16.mxu0 0
        %268 = vmatpush2.bf16.msra.mxu0 0
        %269 = vmatprep.subr.bf16.mxu0 0
        %270 = vmatpush2.bf16.msra.mxu0 0
        %271 = vmatprep.subr.bf16.mxu0 0
        %272 = vmatpush2.bf16.msra.mxu0 0
        %273 = vmatprep.subr.bf16.mxu0 0
        %274 = vmatpush2.bf16.msra.mxu0 0
        %275 = vmatprep.subr.bf16.mxu0 0
        %276 = vmatpush2.bf16.msra.mxu0 0
        %277 = vmatprep.mubr.bf16.mxu0 0
        %278 = vmatmul.mubr.bf16.gmra.mxu0 %v234
        %v279 = vpop.f32.mrf.mxu0
        %v280 = vadd.f32 %v192, %v279
        %v281 = vpop.f32.mrf.mxu0
        %v282 = vpop.f32.mrf.mxu0
        %v283 = vadd.f32 %v192, %v282
        %v284 = vpop.f32.mrf.mxu0
        %285 = vmatprep.mubr.bf16.mxu0 0
        %286 = vmatmul.mubr.bf16.gmra.mxu0 %v237
        %v287 = vpop.f32.mrf.mxu0
        %v288 = vadd.f32 %v192, %v287
        %v289 = vpop.f32.mrf.mxu0
        %v290 = vpop.f32.mrf.mxu0
        %v291 = vadd.f32 %v192, %v290
        %v292 = vpop.f32.mrf.mxu0
        %293 = vmatprep.mubr.bf16.mxu0 0
        %294 = vmatmul.mubr.bf16.gmra.mxu0 %v240
        %v295 = vpop.f32.mrf.mxu0
        %v296 = vadd.f32 %v192, %v295
        %v297 = vpop.f32.mrf.mxu0
        %v298 = vpop.f32.mrf.mxu0
        %v299 = vadd.f32 %v192, %v298
        %v300 = vpop.f32.mrf.mxu0
        %301 = vmatprep.mubr.bf16.mxu0 0
        %302 = vmatmul.mubr.bf16.gmra.mxu0 %v243
        %v303 = vpop.f32.mrf.mxu0
        %v304 = vadd.f32 %v192, %v303
        %v305 = vpop.f32.mrf.mxu0
        %v306 = vpop.f32.mrf.mxu0
        %v307 = vadd.f32 %v192, %v306
        %v308 = vpop.f32.mrf.mxu0
        %309 = vdwg.mxu0
        %310 = vst [vmem:[%s164] sm:$0xff] %v280
        %311 = vst [vmem:[%s164 + $0x8] sm:$0xff] %v283
        %312 = vst [vmem:[%s164 + $0x10] sm:$0xff] %v288
        %313 = vst [vmem:[%s164 + $0x18] sm:$0xff] %v291
        %314 = vst [vmem:[%s164 + $0x20] sm:$0xff] %v296
        %315 = vst [vmem:[%s164 + $0x28] sm:$0xff] %v299
        %316 = vst [vmem:[%s164 + $0x30] sm:$0xff] %v304
        %317 = vst [vmem:[%s164 + $0x38] sm:$0xff] %v307
        %s318 = sand.u32 %s93, 1
        %s319 = scalar_lea.sflag [#allocation3], %s318
        %s320 = sand.u32 %s93, 1
        %s321 = smul.addr %s320, 64
        %s322 = scalar_lea.vmem [#allocation2], %s321
        // Predicated region
        $region33: #{patch_embedding_pallas.1} parent=31 // pred_check
          %p323 = pneg %p103
        $region34: #{patch_embedding_pallas.1} parent=31 // pred_check_branch
          %325 = sbr.rel (%p323) target = $region36
        $region35: #{patch_embedding_pallas.1} parent=31 // pred_region
          %s326 = smul.u32 8, %s17
          %s328 = ssub.s32 1024, 1024
          %329 = vsyncadd %s319, %s328
          %s330 = smul.addr %s326, 128
          %s331 = scalar_lea.hbm %s3, %s330
          %s332 = sshll.u32 %s322, 4
          %s333 = int_to_ptr.vmem [resolvable:$true] %s332
          %338 = dma.vmem_to_hbm [thread:$0]  %s333, 1024, %s331, %s319, 128, 128, 8
        $region36: #{patch_embedding_pallas.1} parent=31 // pred_fallthru
          _
      $region32: #{patch_embedding_pallas.1} parent=5 // pred_fallthru
        _
      %p339 = scmp.le.s32.totalorder 2, %s12
      // Predicated region
      $region37: #{patch_embedding_pallas.1} parent=5 // pred_check
        %p340 = pneg %p339
      $region38: #{patch_embedding_pallas.1} parent=5 // pred_check_branch
        %342 = sbr.rel (%p340) target = $region40
      $region39: #{patch_embedding_pallas.1} parent=5 // pred_region
        %s343 = ssub.s32 %s12, 2
        // Predicated region
        $region41: #{patch_embedding_pallas.1} parent=39 // pred_check
          %p344 = pneg %p109
        $region42: #{patch_embedding_pallas.1} parent=39 // pred_check_branch
          %346 = sbr.rel (%p344) target = $region44
        $region43: #{patch_embedding_pallas.1} parent=39 // pred_region
          %s347 = sand.u32 %s94, 1
          %s348 = scalar_lea.sflag [#allocation3], %s347
          %s349 = sand.u32 %s94, 1
          %s350 = smul.addr %s349, 64
          %s351 = scalar_lea.vmem [#allocation2], %s350
          %352 = dma.done %s348, 1024
        $region44: #{patch_embedding_pallas.1} parent=39 // pred_fallthru
          _
      $region40: #{patch_embedding_pallas.1} parent=5 // pred_fallthru
        _
    $region6: #{patch_embedding_pallas.1} parent=1 // loop_footer
      %s16 = sadd.s32 1, %s12
    $region7: #{patch_embedding_pallas.1} parent=1 // loop_footer_branch
      %11 = sbr.rel target = $region3
    $region8: #{patch_embedding_pallas.1} parent=1 // loop_exit
      _
    %353 = vsyncpa [#allocation3], 1
    %s354 = scalar_lea.sflag [#allocation3], 1
    %355 = vsyncpa %s354, 1

</llo_original>
